<compile_context>
chip_gen: v6e
topology: v6e:2x2x1
jax: 0.10.0
libtpu: 0.0.40
codegen_flags: <defaults>
</compile_context>

<pallas_src>
import math

import jax
import jax.numpy as jnp
from jax.experimental import pallas as pl
from jax.experimental.pallas import tpu as pltpu

_LANES = 128
_SUBLANES = 8
_TARGET_BLOCK_BYTES = 4 << 20    # ~4 MiB of x payload per block (dtype-aware)
_VMEM_LIMIT_BYTES = 32 << 20     # double-buffered in+out(+scale) fits on all gens


def _drop_path_kernel(scale_ref, x_ref, o_ref):
    # scale_ref: (bs, 1, 1) per-sample scale (0 or 1/keep_prob), native dtype.
    # x_ref/o_ref: (bs, sb, 128) lane-dense tile.  Single broadcast multiply;
    # the op is HBM-bandwidth bound, so this is all the compute there is.
    o_ref[...] = x_ref[...] * scale_ref[...]


def drop_path_pallas(x, seed, drop_prob: float = 0.0, training: bool = False):
    """JAX/Pallas equivalent of timm's drop_path (per-sample stochastic depth)."""
    if drop_prob == 0.0 or not training:
        return x
    if x.size == 0:
        return x

    keep_prob = 1.0 - float(drop_prob)
    orig_shape = x.shape
    B = orig_shape[0]
    L = int(math.prod(orig_shape[1:])) if x.ndim > 1 else 1

    # Per-sample Bernoulli(keep_prob), same math as the PyTorch reference:
    # floor(keep_prob + U[0,1)) -> {0, 1}.  Computed with jax.random outside
    # the kernel (a per-sample scalar decision needs no in-kernel PRNG).
    key = jax.random.PRNGKey(seed)
    u = jax.random.uniform(key, (B,), dtype=jnp.float32)
    keep = jnp.floor(jnp.float32(keep_prob) + u)
    # Pre-fused per-sample scale, broadcast inside the kernel.  Native dtype
    # multiply (the ~0.2% rounding of 1/keep_prob in bf16 is acceptable here).
    scale = (keep * jnp.float32(1.0 / keep_prob)).astype(x.dtype).reshape(B, 1, 1)

    # Lane-dense retiling: flatten each sample and view it as (rows, 128).
    # Pad to a multiple of 128 when needed so every block is lane/sublane
    # dense (unmasked vst) and bounded in size.
    x2 = x.reshape(B, L)
    Lp = pl.cdiv(L, _LANES) * _LANES
    if Lp != L:
        x2 = jnp.pad(x2, ((0, 0), (0, Lp - L)))
    rows = Lp // _LANES
    x3 = x2.reshape(B, rows, _LANES)

    itemsize = jnp.dtype(x.dtype).itemsize
    block_cap_elems = max(_SUBLANES * _LANES, _TARGET_BLOCK_BYTES // itemsize)
    # Per-sample VMEM footprint estimate: rows padded to a sublane multiple for
    # the x/out tiles, plus one padded (8,128) tile for the per-sample scale.
    rows_pad8 = pl.cdiv(rows, _SUBLANES) * _SUBLANES
    padded_per_sample = rows_pad8 * _LANES + _SUBLANES * _LANES

    if padded_per_sample >= block_cap_elems:
        # Large per-sample payload: one sample per block, tile the row axis in
        # sublane-multiple chunks (ragged tail handled by Pallas masking).
        bs = 1
        sb = (block_cap_elems // _LANES) // _SUBLANES * _SUBLANES
        sb = max(_SUBLANES, min(sb, rows))
    else:
        # Small per-sample payload: pack samples per block up to ~4 MiB, but
        # keep >= ~8 grid steps when the batch allows so both v7x TensorCores
        # (and megacore on v5e/v6e) get work.
        sb = rows
        bs_vmem = max(1, block_cap_elems // padded_per_sample)
        bs_steps = max(1, pl.cdiv(B, 8))
        bs = max(1, min(B, bs_vmem, bs_steps))

    grid = (pl.cdiv(B, bs), pl.cdiv(rows, sb))
    x_block = (bs, sb, _LANES)
    s_block = (bs, 1, 1)

    out3 = pl.pallas_call(
        _drop_path_kernel,
        out_shape=jax.ShapeDtypeStruct(x3.shape, x.dtype),
        grid=grid,
        in_specs=[
            pl.BlockSpec(s_block, lambda i, j: (i, 0, 0)),
            pl.BlockSpec(x_block, lambda i, j: (i, j, 0)),
        ],
        out_specs=pl.BlockSpec(x_block, lambda i, j: (i, j, 0)),
        compiler_params=pltpu.CompilerParams(
            dimension_semantics=("parallel", "parallel"),
            vmem_limit_bytes=_VMEM_LIMIT_BYTES,
        ),
        # TODO(synk): with a donated input at the jit boundary, add
        # input_output_aliases={1: 0} to reuse x's HBM buffer for the output;
        # without donation XLA would insert a defensive copy, so it is omitted.
    )(scale, x3)

    if Lp != L:
        out3 = out3.reshape(B, Lp)[:, :L]
    return out3.reshape(orig_shape)


class DropPath:
    """Stateless JAX mirror of the PyTorch DropPath module."""

    def __init__(self, drop_prob=None):
        self.drop_prob = drop_prob
        self.training = True

    def __call__(self, x, seed=0):
        # NOTE: vary `seed` across calls/steps to get independent drop masks.
        p = 0.0 if self.drop_prob is None else self.drop_prob
        return drop_path_pallas(x, seed, p, self.training)


if __name__ == "__main__":
    key = jax.random.PRNGKey(0)
    B, N, D = 2, 8, 32
    x = jax.random.normal(key, (B, N, D), dtype=jnp.float32)

    module = DropPath(drop_prob=0.25)
    keep_prob = 1.0 - 0.25

    # Training path (stochastic): each sample is either zeroed or scaled by
    # 1/keep_prob.
    y = jax.block_until_ready(module(x, seed=123))
    ok = (y.shape == x.shape) and (y.dtype == x.dtype)
    for b in range(B):
        row = y[b]
        zeroed = bool(jnp.all(row == 0.0))
        kept = bool(jnp.allclose(row, x[b] / keep_prob, atol=1e-5, rtol=1e-5))
        if not (zeroed or kept):
            ok = False

    # Training path with a non-multiple-of-128 per-sample payload
    # (exercises the zero-pad retiling path).
    x_odd = jax.random.normal(jax.random.PRNGKey(1), (2, 5, 7), dtype=jnp.float32)
    y_odd = jax.block_until_ready(module(x_odd, seed=7))
    if y_odd.shape != x_odd.shape or y_odd.dtype != x_odd.dtype:
        ok = False
    for b in range(x_odd.shape[0]):
        row = y_odd[b]
        zeroed = bool(jnp.all(row == 0.0))
        kept = bool(jnp.allclose(row, x_odd[b] / keep_prob, atol=1e-5, rtol=1e-5))
        if not (zeroed or kept):
            ok = False

    # Eval path must be identity.
    module.training = False
    y_eval = jax.block_until_ready(module(x, seed=123))
    if not bool(jnp.array_equal(y_eval, x)):
        ok = False

    print("KERNEL_OK" if ok else "KERNEL_MISMATCH")
</pallas_src>

<mosaic_0001>
module attributes {stable_mosaic.version = 11 : i64} {
  func.func @_drop_path_kernel(%arg0: i32, %arg1: i32, %arg2: memref<1x1x1xf32, #tpu.memory_space<vmem>>, %arg3: memref<1x2x128xf32, #tpu.memory_space<vmem>>, %arg4: memref<1x2x128xf32, #tpu.memory_space<vmem>>) attributes {dimension_semantics = [#tpu.dimension_semantics<parallel>, #tpu.dimension_semantics<parallel>], iteration_bounds = array<i64: 2, 1>, scalar_prefetch = 0 : i64, scratch_operands = 0 : i64, tpu.core_type = #tpu.core_type<tc>, window_params = [{transform_indices = @transform_0, window_bounds = array<i64: 1, 1, 1>}, {transform_indices = @transform_1, window_bounds = array<i64: 1, 2, 128>}, {transform_indices = @transform_2, window_bounds = array<i64: 1, 2, 128>}]} {
    %c0 = arith.constant 0 : index
    %c0_0 = arith.constant 0 : index
    %c0_1 = arith.constant 0 : index
    %0 = vector.load %arg3[%c0, %c0_0, %c0_1] : memref<1x2x128xf32, #tpu.memory_space<vmem>>, vector<1x2x128xf32>
    %c0_2 = arith.constant 0 : index
    %c0_3 = arith.constant 0 : index
    %c0_4 = arith.constant 0 : index
    %1 = vector.load %arg2[%c0_2, %c0_3, %c0_4] : memref<1x1x1xf32, #tpu.memory_space<vmem>>, vector<1x1x1xf32>
    %2 = vector.broadcast %1 : vector<1x1x1xf32> to vector<1x2x128xf32>
    %3 = arith.mulf %0, %2 : vector<1x2x128xf32>
    %c0_5 = arith.constant 0 : index
    %c0_6 = arith.constant 0 : index
    %c0_7 = arith.constant 0 : index
    %4 = vector.load %arg4[%c0_5, %c0_6, %c0_7] : memref<1x2x128xf32, #tpu.memory_space<vmem>>, vector<1x2x128xf32>
    tpu.vector_store %arg4[%c0_5, %c0_6, %c0_7], %3 {strides = array<i32>} : memref<1x2x128xf32, #tpu.memory_space<vmem>>, vector<1x2x128xf32>,
    return
  }
  func.func @transform_0(%arg0: i32, %arg1: i32) -> (i32, i32, i32) {
    %c0_i32 = arith.constant 0 : i32
    %c0_i32_0 = arith.constant 0 : i32
    %c0_i32_1 = arith.constant 0 : i32
    return %arg0, %c0_i32, %c0_i32_0 : i32, i32, i32
  }
  func.func @transform_1(%arg0: i32, %arg1: i32) -> (i32, i32, i32) {
    %c0_i32 = arith.constant 0 : i32
    %c0_i32_0 = arith.constant 0 : i32
    return %arg0, %arg1, %c0_i32 : i32, i32, i32
  }
  func.func @transform_2(%arg0: i32, %arg1: i32) -> (i32, i32, i32) {
    %c0_i32 = arith.constant 0 : i32
    %c0_i32_0 = arith.constant 0 : i32
    return %arg0, %arg1, %c0_i32 : i32, i32, i32
  }
}

</mosaic_0001>

<llo_original>
// kernel: tpu_custom_call.1
$region0: #{tpu_custom_call.1}
  #allocation0 [shape = 'u32[]', space=smem, size = 0x4, offset = 0x4, fixed_abs, tag = 'smem constant byte address 0x4 - core index']
  #allocation1 [shape = 'u32[144,128]{1,0:T(1,128)}', space=vmem, size = 0x12000, scoped, tag = 'internal scratch']
  %s0 = inlined_call_operand.vmem [shape: f32[2,1,1], index: 0, kind: input, shape index: {}]
  %s1 = inlined_call_operand.vmem [shape: f32[2,2,128], index: 1, kind: input, shape index: {}]
  %s2 = inlined_call_operand.hbm [shape: f32[2,2,128], index: 2, kind: output, shape index: {}]
  %s3 = sld [smem:[#allocation0]]
  $region41: #{tpu_custom_call.1} parent=0
    _
  %s5 = ssub.s32 1, %s3
  %s6 = scalar_select 0, %s5, %s3
  $region1: #{tpu_custom_call.1} parent=0
    #allocation2 [shape = 'u8[2048]{0}', space=vmem, size = 0x800, scoped, tag = 'output window, operand 0']
    #allocation3 [shape = 's32[2]{0}', space=sflag, size = 0x8, scoped, tag = 'scoped memory for tpu_custom_call.1']
    %7 = vsyncpa [#allocation3], 0
    %s8 = scalar_lea.sflag [#allocation3], 1
    %9 = vsyncpa %s8, 0
    loop: start=0, step=1, limit=4
    $region2: #{tpu_custom_call.1} parent=1 // loop_pre_header
      _
    $region3: #{tpu_custom_call.1} parent=1 // loop_header
      %s11 = sphi 0, %s15
      %p12 = scmp.ge.s32.totalorder %s11, 4
      %s18 = sphi 0, %s30
      %s19 = sphi 0, %s26
      %s20 = sphi 0, %s18
      %s21 = sphi 0, %s19
      %s22 = sphi 0, %s20
      %s23 = sphi 0, %s21
      %s33 = sphi 0, %s35
      %s36 = sphi 0, %s33
      %s37 = sphi 0, %s36
      %s53 = sphi 0, %s37
      %s61 = sphi 0, %s63
      %s64 = sphi 0, %s61
      %s65 = sphi 0, %s64
      %s81 = sphi 0, %s65
      %s89 = sphi 0, %s91
      %s92 = sphi 0, %s89
      %s93 = sphi 0, %s92
      %s109 = sphi 0, %s93
    $region4: #{tpu_custom_call.1} parent=1 // loop_header_branch
      %14 = sbr.rel (%p12) target = $region8
    $region5: #{tpu_custom_call.1} parent=1 // loop_body
      %s16 = ssub.s32 %s11, 1
      %s17 = ssub.s32 %s11, 2
      %s24 = sadd.s32 1, %s19
      %p25 = scmp.ge.s32.totalorder %s24, 1
      %s26 = scalar_select %p25, 0, %s24
      %s27 = sadd.s32 1, %s18
      %s28 = scalar_select %p25, %s27, %s18
      %p29 = scmp.ge.s32.totalorder %s28, 2
      %s30 = scalar_select %p29, 0, %s28
      %s31 = ssub.s32 %s18, %s30
      %p32 = scmp.eq.s32.totalorder %s31, 0
      %s34 = sadd.s32 %s33, 1
      %s35 = scalar_select %p32, %s33, %s34
      %p38 = pneg %p32
      %p39 = scmp.eq.s32.totalorder %s11, 1
      %p40 = por %p38, %p39
      %p41 = scmp.ne.s32.totalorder %s33, %s36
      %p42 = scmp.eq.s32.totalorder %s11, 0
      %p43 = por %p41, %p42
      %p44 = scmp.ne.s32.totalorder %s33, %s36
      %p45 = scmp.eq.s32.totalorder %s16, 1
      %p46 = por %p44, %p45
      %p47 = scmp.ne.s32.totalorder %s36, %s37
      %p48 = scmp.eq.s32.totalorder %s16, 0
      %p49 = por %p47, %p48
      %p50 = scmp.ne.s32.totalorder %s36, %s37
      %p51 = scmp.eq.s32.totalorder %s17, 1
      %p52 = por %p50, %p51
      %p54 = scmp.ne.s32.totalorder %s37, %s53
      %p55 = scmp.eq.s32.totalorder %s17, 0
      %p56 = por %p54, %p55
      %s57 = ssub.s32 %s18, %s30
      %s58 = ssub.s32 %s19, %s26
      %s59 = sor.u32 %s57, %s58
      %p60 = scmp.eq.s32.totalorder %s59, 0
      %s62 = sadd.s32 %s61, 1
      %s63 = scalar_select %p60, %s61, %s62
      %p66 = pneg %p60
      %p67 = scmp.eq.s32.totalorder %s11, 1
      %p68 = por %p66, %p67
      %p69 = scmp.ne.s32.totalorder %s61, %s64
      %p70 = scmp.eq.s32.totalorder %s11, 0
      %p71 = por %p69, %p70
      %p72 = scmp.ne.s32.totalorder %s61, %s64
      %p73 = scmp.eq.s32.totalorder %s16, 1
      %p74 = por %p72, %p73
      %p75 = scmp.ne.s32.totalorder %s64, %s65
      %p76 = scmp.eq.s32.totalorder %s16, 0
      %p77 = por %p75, %p76
      %p78 = scmp.ne.s32.totalorder %s64, %s65
      %p79 = scmp.eq.s32.totalorder %s17, 1
      %p80 = por %p78, %p79
      %p82 = scmp.ne.s32.totalorder %s65, %s81
      %p83 = scmp.eq.s32.totalorder %s17, 0
      %p84 = por %p82, %p83
      %s85 = ssub.s32 %s18, %s30
      %s86 = ssub.s32 %s19, %s26
      %s87 = sor.u32 %s85, %s86
      %p88 = scmp.eq.s32.totalorder %s87, 0
      %s90 = sadd.s32 %s89, 1
      %s91 = scalar_select %p88, %s89, %s90
      %p94 = pneg %p88
      %p95 = scmp.eq.s32.totalorder %s11, 1
      %p96 = por %p94, %p95
      %p97 = scmp.ne.s32.totalorder %s89, %s92
      %p98 = scmp.eq.s32.totalorder %s11, 0
      %p99 = por %p97, %p98
      %p100 = scmp.ne.s32.totalorder %s89, %s92
      %p101 = scmp.eq.s32.totalorder %s16, 1
      %p102 = por %p100, %p101
      %p103 = scmp.ne.s32.totalorder %s92, %s93
      %p104 = scmp.eq.s32.totalorder %s16, 0
      %p105 = por %p103, %p104
      %p106 = scmp.ne.s32.totalorder %s92, %s93
      %p107 = scmp.eq.s32.totalorder %s17, 1
      %p108 = por %p106, %p107
      %p110 = scmp.ne.s32.totalorder %s93, %s109
      %p111 = scmp.eq.s32.totalorder %s17, 0
      %p112 = por %p110, %p111
      %p113 = scmp.le.s32.totalorder 1, %s11
      %p114 = scmp.lt.s32.totalorder %s11, 3
      %p115 = pnand %p113, %p114
      %p116 = pneg %p115
      // Predicated region
      $region9: #{tpu_custom_call.1} parent=5 // pred_check
        _
      $region10: #{tpu_custom_call.1} parent=5 // pred_check_branch
        %118 = sbr.rel (%p115) target = $region12
      $region11: #{tpu_custom_call.1} parent=5 // pred_region
        %s119 = ssub.s32 %s11, 1
      $region12: #{tpu_custom_call.1} parent=5 // pred_fallthru
        _
      %p120 = scmp.lt.s32.totalorder %s11, 2
      // Predicated region
      $region13: #{tpu_custom_call.1} parent=5 // pred_check
        %p121 = pneg %p120
      $region14: #{tpu_custom_call.1} parent=5 // pred_check_branch
        %123 = sbr.rel (%p121) target = $region16
      $region15: #{tpu_custom_call.1} parent=5 // pred_region
        // Predicated region
        $region17: #{tpu_custom_call.1} parent=15 // pred_check
          %p124 = pneg %p43
        $region18: #{tpu_custom_call.1} parent=15 // pred_check_branch
          %126 = sbr.rel (%p124) target = $region20
        $region19: #{tpu_custom_call.1} parent=15 // pred_region
          %p127 = scmp.lt.s32.totalorder %s18, 1
          %s128 = scalar_select %p127, %s18, 1
          %s129 = scalar_lea.vmem %s0, %s128
        $region20: #{tpu_custom_call.1} parent=15 // pred_fallthru
          _
        // Predicated region
        $region21: #{tpu_custom_call.1} parent=15 // pred_check
          %p130 = pneg %p71
        $region22: #{tpu_custom_call.1} parent=15 // pred_check_branch
          %132 = sbr.rel (%p130) target = $region24
        $region23: #{tpu_custom_call.1} parent=15 // pred_region
          %p133 = scmp.lt.s32.totalorder %s18, 1
          %s134 = scalar_select %p133, %s18, 1
          %p135 = scmp.lt.s32.totalorder %s19, 0
          %s136 = scalar_select %p135, %s19, 0
          %s137 = sadd.s32 %s136, %s134
          %s138 = smul.addr %s137, 2
          %s139 = scalar_lea.vmem %s1, %s138
        $region24: #{tpu_custom_call.1} parent=15 // pred_fallthru
          _
      $region16: #{tpu_custom_call.1} parent=5 // pred_fallthru
        _
      %p140 = scmp.le.s32.totalorder 1, %s11
      %p141 = scmp.lt.s32.totalorder %s11, 3
      %p142 = pnand %p140, %p141
      %p143 = pneg %p142
      // Predicated region
      $region25: #{tpu_custom_call.1} parent=5 // pred_check
        _
      $region26: #{tpu_custom_call.1} parent=5 // pred_check_branch
        %145 = sbr.rel (%p142) target = $region28
      $region27: #{tpu_custom_call.1} parent=5 // pred_region
        %s146 = ssub.s32 %s11, 1
        %p147 = scmp.lt.s32.totalorder %s20, 1
        %s148 = scalar_select %p147, %s20, 1
        %s149 = scalar_lea.vmem %s0, %s148
        %p150 = pneg %p49
        %p151 = pneg %p46
        %p152 = scmp.lt.s32.totalorder %s20, 1
        %s153 = scalar_select %p152, %s20, 1
        %p154 = scmp.lt.s32.totalorder %s21, 0
        %s155 = scalar_select %p154, %s21, 0
        %s156 = sadd.s32 %s155, %s153
        %s157 = smul.addr %s156, 2
        %s158 = scalar_lea.vmem %s1, %s157
        %p159 = pneg %p77
        %p160 = pneg %p74
        %p161 = pneg %p105
        %p162 = pneg %p102
        %s163 = sand.u32 %s92, 1
        %s164 = scalar_lea.sflag [#allocation3], %s163
        %s165 = sand.u32 %s92, 1
        %s166 = smul.addr %s165, 2
        %s167 = scalar_lea.vmem [#allocation2], %s166
        %p168 = scmp.lt.s32.totalorder %s20, 1
        %s169 = scalar_select %p168, %s20, 1
        %s170 = scalar_lea.vmem %s0, %s169
        %p171 = scmp.lt.s32.totalorder %s20, 1
        %s172 = scalar_select %p171, %s20, 1
        %p173 = scmp.lt.s32.totalorder %s21, 0
        %s174 = scalar_select %p173, %s21, 0
        %s175 = sadd.s32 %s174, %s172
        %s176 = smul.addr %s175, 2
        %s177 = scalar_lea.vmem %s1, %s176
        %v178 = vld [vmem:[%s177] sm:$0x3]
        %v179 = vld [vmem:[%s170] sm:$0x1]
        %v181 = vlaneseq
        %v182 = vshrl.u32 %v181, 7
        %v183 = vsub.s32 0, %v182
        %v184 = vrot.slane %v179, %v183
        %185 = vset.pattern.permute.xlu0 0
        %186 = vperm.xlu0 %185, %v184
        %v187 = vpop.permute.xlu0 %186
        %v189 = vmul.f32 %v178, %v187
        %190 = vst [vmem:[%s167] sm:$0x3] %v189
        %s191 = sand.u32 %s92, 1
        %s192 = scalar_lea.sflag [#allocation3], %s191
        %s193 = sand.u32 %s92, 1
        %s194 = smul.addr %s193, 2
        %s195 = scalar_lea.vmem [#allocation2], %s194
        // Predicated region
        $region29: #{tpu_custom_call.1} parent=27 // pred_check
          %p196 = pneg %p102
        $region30: #{tpu_custom_call.1} parent=27 // pred_check_branch
          %198 = sbr.rel (%p196) target = $region32
        $region31: #{tpu_custom_call.1} parent=27 // pred_region
          %s200 = ssub.s32 32, 32
          %201 = vsyncadd %s192, %s200
          %s202 = sadd.s32 %s21, %s20
          %s203 = smul.addr %s202, 32
          %s204 = scalar_lea.hbm %s2, %s203
          %s206 = sshll.u32 %s195, 4
          %s207 = int_to_ptr.vmem [resolvable:$true] %s206
          %209 = dma.vmem_to_hbm [thread:$0]  %s207, 32, %s204, %s192
        $region32: #{tpu_custom_call.1} parent=27 // pred_fallthru
          _
      $region28: #{tpu_custom_call.1} parent=5 // pred_fallthru
        _
      %p210 = scmp.le.s32.totalorder 2, %s11
      // Predicated region
      $region33: #{tpu_custom_call.1} parent=5 // pred_check
        %p211 = pneg %p210
      $region34: #{tpu_custom_call.1} parent=5 // pred_check_branch
        %213 = sbr.rel (%p211) target = $region36
      $region35: #{tpu_custom_call.1} parent=5 // pred_region
        %s214 = ssub.s32 %s11, 2
        // Predicated region
        $region37: #{tpu_custom_call.1} parent=35 // pred_check
          %p215 = pneg %p108
        $region38: #{tpu_custom_call.1} parent=35 // pred_check_branch
          %217 = sbr.rel (%p215) target = $region40
        $region39: #{tpu_custom_call.1} parent=35 // pred_region
          %s218 = sand.u32 %s93, 1
          %s219 = scalar_lea.sflag [#allocation3], %s218
          %s220 = sand.u32 %s93, 1
          %s221 = smul.addr %s220, 2
          %s222 = scalar_lea.vmem [#allocation2], %s221
          %223 = dma.done %s219, 32
        $region40: #{tpu_custom_call.1} parent=35 // pred_fallthru
          _
      $region36: #{tpu_custom_call.1} parent=5 // pred_fallthru
        _
    $region6: #{tpu_custom_call.1} parent=1 // loop_footer
      %s15 = sadd.s32 1, %s11
    $region7: #{tpu_custom_call.1} parent=1 // loop_footer_branch
      %10 = sbr.rel target = $region3
    $region8: #{tpu_custom_call.1} parent=1 // loop_exit
      _
    %224 = vsyncpa [#allocation3], 1
    %s225 = scalar_lea.sflag [#allocation3], 1
    %226 = vsyncpa %s225, 1

</llo_original>
